<compile_context>
chip_gen: v7x
topology: tpu7x:2x2x1
jax: 0.10.0
libtpu: 0.0.40
codegen_flags: <defaults>
</compile_context>

<pallas_src>
import functools
import inspect

import jax
import jax.numpy as jnp
from jax.experimental import pallas as pl
from jax.experimental.pallas import tpu as pltpu

BN_EPS = 1e-5
_WEIGHT_BUFFERS = 3  # deep-buffer the streamed weight tiles on long-K convs


# -----------------------------------------------------------------------------
# Small helpers
# -----------------------------------------------------------------------------
def _round_up(x, m):
    return ((x + m - 1) // m) * m


@functools.lru_cache(maxsize=1)
def _physical_vmem_bytes():
    """Per-core physical VMEM (v5e/v6e: 128 MiB, v7x: 64 MiB)."""
    try:
        return int(pltpu.get_tpu_info().vmem_capacity_bytes)
    except Exception:
        return 64 * 1024 * 1024  # conservative fallback (v7x-sized)


def _pipeline_footprint_bytes(mp, tk, tn):
    lhs = 2 * mp * tk * 2                  # double-buffered bf16 LHS tiles
    wgt = _WEIGHT_BUFFERS * tk * tn * 2    # streamed bf16 weight tiles
    out = 2 * mp * tn * 4                  # resident f32 output block (+ slack)
    small = 4 * 2 * tn * 4                 # gamma/beta rows
    return lhs + wgt + out + small


def _choose_tk(kp, mp, tn, cap=2048):
    """Largest multiple-of-128 divisor of kp (<= cap) whose footprint fits VMEM budget."""
    budget = max(8 * 1024 * 1024, _physical_vmem_bytes() // 2)
    best = 128
    d = 128
    limit = min(kp, cap)
    while d <= limit:
        if kp % d == 0 and _pipeline_footprint_bytes(mp, d, tn) <= budget:
            best = d
        d += 128
    return best


_HAS_PIPELINE_MODE = hasattr(pl, "Buffered") and (
    "pipeline_mode" in inspect.signature(pl.BlockSpec).parameters
)


def _weight_spec(tk, tn, nk):
    idx = lambda j, k: (k, j)
    if _HAS_PIPELINE_MODE and nk >= 3:
        try:
            # Long-K convs are weight-streaming bound (M is tiny); deeper buffering
            # of the weight tiles hides per-grid-step pipeline overhead.
            return pl.BlockSpec((tk, tn), idx, pipeline_mode=pl.Buffered(_WEIGHT_BUFFERS))
        except Exception:
            pass
    return pl.BlockSpec((tk, tn), idx)


# -----------------------------------------------------------------------------
# Pallas kernel: (Cout, K)-tiled GEMM + fused training-mode BatchNorm (+ReLU)
# -----------------------------------------------------------------------------
def _make_conv_bn_kernel(apply_relu: bool, m_valid: int):
    inv_m = 1.0 / float(m_valid)

    def kernel(x_ref, w_ref, g_ref, b_ref, o_ref):
        k = pl.program_id(1)

        # bf16 operands on the MXU, f32 accumulation directly into the resident
        # output block (output index_map is constant over the inner K axis).
        prod = jnp.dot(x_ref[...], w_ref[...], preferred_element_type=jnp.float32)

        @pl.when(k == 0)
        def _store():
            o_ref[...] = prod          # no zero-init pass, no reload on step 0

        @pl.when(k > 0)
        def _accumulate():
            o_ref[...] += prod

        @pl.when(k == pl.num_programs(1) - 1)
        def _finalize():
            y = o_ref[...]
            # Training-mode BatchNorm: biased batch statistics over the valid
            # M = N*Ho*Wo rows.  Padded rows are exactly zero, so sum-based
            # statistics divided by m_valid are exact.  Per-channel scale/shift
            # keeps the big-block epilogue to 2 VPU ops/element.
            mean = jnp.sum(y, axis=0, keepdims=True) * inv_m
            var = jnp.maximum(
                jnp.sum(y * y, axis=0, keepdims=True) * inv_m - mean * mean, 0.0
            )
            scale = jax.lax.rsqrt(var + BN_EPS) * g_ref[...]
            shift = b_ref[...] - mean * scale
            out = y * scale + shift
            if apply_relu:
                out = jnp.maximum(out, 0.0)
            o_ref[...] = out

    return kernel


@functools.partial(jax.jit, static_argnames=("apply_relu", "m_valid", "cout"))
def conv_bn_gemm(x_padded, w_packed, gamma_p, beta_p, *, apply_relu, m_valid, cout):
    """x_padded: [Mp, Kp] bf16, w_packed: [Kp, CoutP] bf16 -> [m_valid, cout] f32."""
    Mp, Kp = x_padded.shape
    CoutP = w_packed.shape[1]
    TN = 128                      # lane-dense 128-channel output blocks
    nj = CoutP // TN
    TK = _choose_tk(Kp, Mp, TN)
    nk = Kp // TK

    footprint = _pipeline_footprint_bytes(Mp, TK, TN)
    vmem_limit = int(
        min(_physical_vmem_bytes() - 2 * 1024 * 1024,
            max(32 * 1024 * 1024, 2 * footprint))
    )

    out = pl.pallas_call(
        _make_conv_bn_kernel(apply_relu, m_valid),
        out_shape=jax.ShapeDtypeStruct((Mp, CoutP), jnp.float32),
        grid_spec=pltpu.PrefetchScalarGridSpec(
            num_scalar_prefetch=0,
            grid=(nj, nk),                                   # Cout blocks outer, K inner
            in_specs=[
                pl.BlockSpec((Mp, TK), lambda j, k: (0, k)),  # LHS
                _weight_spec(TK, TN, nk),                     # weights
                pl.BlockSpec((1, TN), lambda j, k: (0, j)),   # gamma
                pl.BlockSpec((1, TN), lambda j, k: (0, j)),   # beta
            ],
            out_specs=pl.BlockSpec((Mp, TN), lambda j, k: (0, j)),
        ),
        compiler_params=pltpu.CompilerParams(
            dimension_semantics=("parallel", "arbitrary"),    # Cout parallel (v7x megacore)
            vmem_limit_bytes=vmem_limit,
        ),
    )(x_padded, w_packed, gamma_p, beta_p)
    return out[:m_valid, :cout]


# -----------------------------------------------------------------------------
# JAX glue: im2col (bf16, pre-padded), align_corners bilinear upsampling
# -----------------------------------------------------------------------------
def _im2col_bf16(x, kh, kw, padding, kp, mp):
    """stride=1, dilation=1 im2col emitting bf16, padded to (mp, kp)."""
    x = x.astype(jnp.bfloat16)
    N, H, W, C = x.shape
    Ho = H + 2 * padding - kh + 1
    Wo = W + 2 * padding - kw + 1
    xp = jnp.pad(x, ((0, 0), (padding, padding), (padding, padding), (0, 0)))
    cols = []
    for ki in range(kh):
        for kj in range(kw):
            cols.append(
                jax.lax.slice(xp, (0, ki, kj, 0), (N, ki + Ho, kj + Wo, C))
            )  # [N, Ho, Wo, C]
    cols = jnp.stack(cols, axis=-1)                     # [N, Ho, Wo, C, kh*kw]
    patches = cols.reshape(N * Ho * Wo, C * kh * kw)    # matches w.reshape(cout, cin*kh*kw)
    m, k = patches.shape
    return jnp.pad(patches, ((0, mp - m), (0, kp - k)))


def conv_block(x, p, cfg, *, relu=True):
    """convolution_block: Conv2d(bias=False) + BatchNorm2d (batch stats) + ReLU."""
    cin, cout, ksize, padding = cfg
    Kp, _ = p["w"].shape
    N, H, W, _ = x.shape
    Ho = H + 2 * padding - ksize + 1
    Wo = W + 2 * padding - ksize + 1
    M = N * Ho * Wo
    Mp = _round_up(M, 16)  # bf16 LHS: sublane-packed 16-row tiles
    if ksize == 1 and padding == 0:
        # 1x1 fast path: no im2col, just reshape + cast + pad.
        patches = jnp.pad(
            x.reshape(M, cin).astype(jnp.bfloat16), ((0, Mp - M), (0, Kp - cin))
        )
    else:
        patches = _im2col_bf16(x, ksize, ksize, padding, Kp, Mp)
    out = conv_bn_gemm(
        patches, p["w"], p["gamma"], p["beta"],
        apply_relu=relu, m_valid=M, cout=cout,
    )
    return out.reshape(N, Ho, Wo, cout)


def upsample_bilinear_align_corners(x, out_h, out_w):
    """nn.UpsamplingBilinear2d semantics (align_corners=True), NHWC layout."""
    N, H, W, C = x.shape

    def idx(in_size, out_size):
        if in_size == 1 or out_size == 1:
            z = jnp.zeros((out_size,), jnp.int32)
            return z, z, jnp.zeros((out_size,), jnp.float32)
        scale = (in_size - 1) / (out_size - 1)
        src = jnp.arange(out_size, dtype=jnp.float32) * scale
        i0 = jnp.clip(jnp.floor(src).astype(jnp.int32), 0, in_size - 1)
        i1 = jnp.clip(i0 + 1, 0, in_size - 1)
        return i0, i1, src - i0.astype(jnp.float32)

    r0, r1, rw = idx(H, out_h)
    c0, c1, cw = idx(W, out_w)
    rw = rw[None, :, None, None]
    cw = cw[None, None, :, None]
    x_r0 = x[:, r0]
    x_r1 = x[:, r1]
    top = x_r0[:, :, c0] * (1.0 - cw) + x_r0[:, :, c1] * cw
    bot = x_r1[:, :, c0] * (1.0 - cw) + x_r1[:, :, c1] * cw
    return top * (1.0 - rw) + bot * rw


# -----------------------------------------------------------------------------
# Parameter construction: pack weights/BN params ONCE (bf16 [Kp, CoutP], f32 rows)
# -----------------------------------------------------------------------------
def _pack_conv_bn(w, gamma, beta):
    cout, cin, kh, kw = w.shape
    K = cin * kh * kw
    Kp = _round_up(K, 128)
    CoutP = _round_up(cout, 128)
    w_mat = jnp.transpose(w.reshape(cout, K))            # [K, Cout]
    w_packed = jnp.pad(w_mat.astype(jnp.bfloat16), ((0, Kp - K), (0, CoutP - cout)))
    gamma_p = jnp.pad(gamma.reshape(1, cout).astype(jnp.float32),
                      ((0, 0), (0, CoutP - cout)))
    beta_p = jnp.pad(beta.reshape(1, cout).astype(jnp.float32),
                     ((0, 0), (0, CoutP - cout)))
    return {"w": w_packed, "gamma": gamma_p, "beta": beta_p}


def init_conv_bn(key, cin, cout, ksize):
    kw_, kg, kb = jax.random.split(key, 3)
    fan_in = cin * ksize * ksize
    w = jax.random.normal(kw_, (cout, cin, ksize, ksize), jnp.float32) / (fan_in ** 0.5)
    gamma = 1.0 + 0.05 * jax.random.normal(kg, (cout,), jnp.float32)
    beta = 0.05 * jax.random.normal(kb, (cout,), jnp.float32)
    return _pack_conv_bn(w, gamma, beta)


def init_decoder_params(key, dim_a, num_classes):
    k = jax.random.split(key, 4)
    params = {
        "conv_a": init_conv_bn(k[0], dim_a[0], dim_a[1], 1),                  # 1x1
        "conv1": init_conv_bn(k[1], dim_a[0] * 4 + dim_a[1], dim_a[0], 3),    # 3x3
        "conv2": init_conv_bn(k[2], dim_a[0], dim_a[0], 3),                   # 3x3
        "conv3": init_conv_bn(k[3], dim_a[0], num_classes, 1),                # 1x1
    }
    # Static (hashable) per-conv config: (cin, cout, ksize, padding)
    meta = (
        (dim_a[0], dim_a[1], 1, 0),
        (dim_a[0] * 4 + dim_a[1], dim_a[0], 3, 1),
        (dim_a[0], dim_a[0], 3, 1),
        (dim_a[0], num_classes, 1, 0),
    )
    return params, meta


# -----------------------------------------------------------------------------
# decoder.forward(inputs_a, inputs_b)
# -----------------------------------------------------------------------------
@functools.partial(jax.jit, static_argnames=("meta",))
def decoder_forward(params, inputs_a_nchw, inputs_b_nchw, *, meta):
    cfg_a, cfg1, cfg2, cfg3 = meta
    x_a_in = jnp.transpose(inputs_a_nchw, (0, 2, 3, 1)).astype(jnp.float32)
    x_b_in = jnp.transpose(inputs_b_nchw, (0, 2, 3, 1)).astype(jnp.float32)

    x_a = conv_block(x_a_in, params["conv_a"], cfg_a, relu=True)            # 1x1 -> dim_a1
    x_b = upsample_bilinear_align_corners(
        x_b_in, x_b_in.shape[1] * 4, x_b_in.shape[2] * 4
    )                                                                        # up x4
    x_cat = jnp.concatenate([x_a, x_b], axis=-1)                             # dim_a0*4 + dim_a1 ch
    x = conv_block(x_cat, params["conv1"], cfg1, relu=True)                  # 3x3 -> dim_a0
    x = conv_block(x, params["conv2"], cfg2, relu=True)                      # 3x3 -> dim_a0
    x = upsample_bilinear_align_corners(x, x.shape[1] * 4, x.shape[2] * 4)   # up x4
    x = conv_block(x, params["conv3"], cfg3, relu=True)                      # 1x1 -> num_classes
    return jnp.transpose(x, (0, 3, 1, 2))                                    # NHWC -> NCHW


# -----------------------------------------------------------------------------
if __name__ == "__main__":
    DIM_A = (256, 64)   # DeepLabV3+ usage: dim_a = (in_c // 4, out_c // 16)
    NUM_CLASSES = 3

    key = jax.random.PRNGKey(0)
    kp, ka, kb = jax.random.split(key, 3)
    params, meta = init_decoder_params(kp, DIM_A, NUM_CLASSES)

    # inputs_a: stride-4 backbone feature; inputs_b: stride-16 encoder feature.
    inputs_a = jax.random.normal(ka, (2, DIM_A[0], 8, 8), jnp.float32)       # NCHW
    inputs_b = jax.random.normal(kb, (2, DIM_A[0] * 4, 2, 2), jnp.float32)   # NCHW

    out = decoder_forward(params, inputs_a, inputs_b, meta=meta)
    out = jax.block_until_ready(out)

    assert out.shape == (2, NUM_CLASSES, 32, 32), out.shape
    assert bool(jnp.all(jnp.isfinite(out)))
    print("KERNEL_OK")
</pallas_src>

<mosaic_0001>
module attributes {stable_mosaic.version = 11 : i64} {
  func.func @kernel(%arg0: i32, %arg1: i32, %arg2: memref<128x256xbf16, #tpu.memory_space<vmem>>, %arg3: memref<256x128xbf16, #tpu.memory_space<vmem>>, %arg4: memref<1x128xf32, #tpu.memory_space<vmem>>, %arg5: memref<1x128xf32, #tpu.memory_space<vmem>>, %arg6: memref<128x128xf32, #tpu.memory_space<vmem>>) attributes {dimension_semantics = [#tpu.dimension_semantics<parallel>, #tpu.dimension_semantics<arbitrary>], iteration_bounds = array<i64: 1, 1>, scalar_prefetch = 0 : i64, scratch_operands = 0 : i64, tpu.core_type = #tpu.core_type<tc>, window_params = [{transform_indices = @transform_0, window_bounds = array<i64: 128, 256>}, {transform_indices = @transform_1, window_bounds = array<i64: 256, 128>}, {transform_indices = @transform_2, window_bounds = array<i64: 1, 128>}, {transform_indices = @transform_3, window_bounds = array<i64: 1, 128>}, {transform_indices = @transform_4, window_bounds = array<i64: 128, 128>}]} {
    %c0 = arith.constant 0 : index
    %c0_0 = arith.constant 0 : index
    %0 = vector.load %arg2[%c0, %c0_0] : memref<128x256xbf16, #tpu.memory_space<vmem>>, vector<128x256xbf16>
    %c0_1 = arith.constant 0 : index
    %c0_2 = arith.constant 0 : index
    %1 = vector.load %arg3[%c0_1, %c0_2] : memref<256x128xbf16, #tpu.memory_space<vmem>>, vector<256x128xbf16>
    %cst = arith.constant dense<0.000000e+00> : vector<128x128xf32>
    %2 = tpu.matmul %0, %1, %cst {dimension_numbers = #tpu.dot_dimension_numbers<[1], [0], [0], [1], [0, 0, 1, 1], [], []>} : vector<128x256xbf16>, vector<256x128xbf16>, vector<128x128xf32> -> vector<128x128xf32>
    %c0_i32 = arith.constant 0 : i32
    %3 = arith.cmpi eq, %arg1, %c0_i32 : i32
    %4 = arith.extui %3 : i1 to i32
    %c0_i32_3 = arith.constant 0 : i32
    %5 = arith.cmpi ne, %4, %c0_i32_3 : i32
    scf.if %5 {
      %c0_8 = arith.constant 0 : index
      %c0_9 = arith.constant 0 : index
      %12 = vector.load %arg6[%c0_8, %c0_9] : memref<128x128xf32, #tpu.memory_space<vmem>>, vector<128x128xf32>
      tpu.vector_store %arg6[%c0_8, %c0_9], %2 {strides = array<i32>} : memref<128x128xf32, #tpu.memory_space<vmem>>, vector<128x128xf32>,
    } else {
    }
    %c0_i32_4 = arith.constant 0 : i32
    %6 = arith.cmpi sgt, %arg1, %c0_i32_4 : i32
    %7 = arith.extui %6 : i1 to i32
    %c0_i32_5 = arith.constant 0 : i32
    %8 = arith.cmpi ne, %7, %c0_i32_5 : i32
    scf.if %8 {
      %c0_8 = arith.constant 0 : index
      %c0_9 = arith.constant 0 : index
      %12 = vector.load %arg6[%c0_8, %c0_9] : memref<128x128xf32, #tpu.memory_space<vmem>>, vector<128x128xf32>
      %13 = arith.addf %12, %2 : vector<128x128xf32>
      %c0_10 = arith.constant 0 : index
      %c0_11 = arith.constant 0 : index
      %14 = vector.load %arg6[%c0_10, %c0_11] : memref<128x128xf32, #tpu.memory_space<vmem>>, vector<128x128xf32>
      tpu.vector_store %arg6[%c0_10, %c0_11], %13 {strides = array<i32>} : memref<128x128xf32, #tpu.memory_space<vmem>>, vector<128x128xf32>,
    } else {
    }
    %c0_i32_6 = arith.constant 0 : i32
    %9 = arith.cmpi eq, %arg1, %c0_i32_6 : i32
    %10 = arith.extui %9 : i1 to i32
    %c0_i32_7 = arith.constant 0 : i32
    %11 = arith.cmpi ne, %10, %c0_i32_7 : i32
    scf.if %11 {
      %c0_8 = arith.constant 0 : index
      %c0_9 = arith.constant 0 : index
      %12 = vector.load %arg6[%c0_8, %c0_9] : memref<128x128xf32, #tpu.memory_space<vmem>>, vector<128x128xf32>
      %cst_10 = arith.constant dense<0.000000e+00> : vector<128xf32>
      %13 = vector.multi_reduction <add>, %12, %cst_10 [0] : vector<128x128xf32> to vector<128xf32>
      %14 = vector.shape_cast %13 : vector<128xf32> to vector<1x128xf32>
      %cst_11 = arith.constant 7.812500e-03 : f32
      %15 = vector.broadcast %cst_11 : f32 to vector<1x128xf32>
      %16 = arith.mulf %14, %15 : vector<1x128xf32>
      %17 = arith.mulf %12, %12 : vector<128x128xf32>
      %cst_12 = arith.constant dense<0.000000e+00> : vector<128xf32>
      %18 = vector.multi_reduction <add>, %17, %cst_12 [0] : vector<128x128xf32> to vector<128xf32>
      %19 = vector.shape_cast %18 : vector<128xf32> to vector<1x128xf32>
      %cst_13 = arith.constant 7.812500e-03 : f32
      %20 = vector.broadcast %cst_13 : f32 to vector<1x128xf32>
      %21 = arith.mulf %19, %20 : vector<1x128xf32>
      %22 = arith.mulf %16, %16 : vector<1x128xf32>
      %23 = arith.subf %21, %22 : vector<1x128xf32>
      %cst_14 = arith.constant 0.000000e+00 : f32
      %24 = vector.broadcast %cst_14 : f32 to vector<1x128xf32>
      %25 = arith.maximumf %23, %24 : vector<1x128xf32>
      %cst_15 = arith.constant 9.99999974E-6 : f32
      %26 = vector.broadcast %cst_15 : f32 to vector<1x128xf32>
      %27 = arith.addf %25, %26 : vector<1x128xf32>
      %28 = math.rsqrt %27 : vector<1x128xf32>
      %c0_16 = arith.constant 0 : index
      %c0_17 = arith.constant 0 : index
      %29 = vector.load %arg4[%c0_16, %c0_17] : memref<1x128xf32, #tpu.memory_space<vmem>>, vector<1x128xf32>
      %30 = arith.mulf %28, %29 : vector<1x128xf32>
      %c0_18 = arith.constant 0 : index
      %c0_19 = arith.constant 0 : index
      %31 = vector.load %arg5[%c0_18, %c0_19] : memref<1x128xf32, #tpu.memory_space<vmem>>, vector<1x128xf32>
      %32 = arith.mulf %16, %30 : vector<1x128xf32>
      %33 = arith.subf %31, %32 : vector<1x128xf32>
      %34 = vector.broadcast %30 : vector<1x128xf32> to vector<128x128xf32>
      %35 = arith.mulf %12, %34 : vector<128x128xf32>
      %36 = vector.broadcast %33 : vector<1x128xf32> to vector<128x128xf32>
      %37 = arith.addf %35, %36 : vector<128x128xf32>
      %cst_20 = arith.constant 0.000000e+00 : f32
      %38 = vector.broadcast %cst_20 : f32 to vector<128x128xf32>
      %39 = arith.maximumf %37, %38 : vector<128x128xf32>
      %c0_21 = arith.constant 0 : index
      %c0_22 = arith.constant 0 : index
      %40 = vector.load %arg6[%c0_21, %c0_22] : memref<128x128xf32, #tpu.memory_space<vmem>>, vector<128x128xf32>
      tpu.vector_store %arg6[%c0_21, %c0_22], %39 {strides = array<i32>} : memref<128x128xf32, #tpu.memory_space<vmem>>, vector<128x128xf32>,
    } else {
    }
    return
  }
  func.func @transform_0(%arg0: i32, %arg1: i32) -> (i32, i32) {
    %c0_i32 = arith.constant 0 : i32
    %c0_i32_0 = arith.constant 0 : i32
    return %c0_i32, %arg1 : i32, i32
  }
  func.func @transform_1(%arg0: i32, %arg1: i32) -> (i32, i32) {
    %c0_i32 = arith.constant 0 : i32
    return %arg1, %arg0 : i32, i32
  }
  func.func @transform_2(%arg0: i32, %arg1: i32) -> (i32, i32) {
    %c0_i32 = arith.constant 0 : i32
    %c0_i32_0 = arith.constant 0 : i32
    return %c0_i32, %arg0 : i32, i32
  }
  func.func @transform_3(%arg0: i32, %arg1: i32) -> (i32, i32) {
    %c0_i32 = arith.constant 0 : i32
    %c0_i32_0 = arith.constant 0 : i32
    return %c0_i32, %arg0 : i32, i32
  }
  func.func @transform_4(%arg0: i32, %arg1: i32) -> (i32, i32) {
    %c0_i32 = arith.constant 0 : i32
    %c0_i32_0 = arith.constant 0 : i32
    return %c0_i32, %arg0 : i32, i32
  }
}

</mosaic_0001>

<llo_original>
// kernel: conv_bn_gemm.1
$region0: #{conv_bn_gemm.1}
  #allocation0 [shape = 'u32[]', space=smem, size = 0x4, offset = 0x4, fixed_abs, tag = 'smem constant byte address 0x4 - core index']
  #allocation1 [shape = 'u32[144,128]{1,0:T(1,128)}', space=vmem, size = 0x12000, scoped, tag = 'internal scratch']
  %s0 = inlined_call_operand.hbm [shape: bf16[128,256], index: 0, kind: input, shape index: {}]
  %s1 = inlined_call_operand.hbm [shape: bf16[256,128], index: 1, kind: input, shape index: {}]
  %s2 = inlined_call_operand.vmem [shape: f32[1,128], index: 2, kind: input, shape index: {}]
  %s3 = inlined_call_operand.vmem [shape: f32[1,128], index: 3, kind: input, shape index: {}]
  %s4 = inlined_call_operand.vmem [shape: f32[128,128], index: 4, kind: output, shape index: {}]
  %s5 = sld [smem:[#allocation0]]
  $region46: #{conv_bn_gemm.1} parent=0
    _
  %s7 = ssub.s32 1, %s5
  %s8 = scalar_select 0, %s7, %s5
  $region1: #{conv_bn_gemm.1} parent=0
    #allocation2 [shape = 'u8[65536]{0}', space=vmem, size = 0x10000, scoped, tag = 'input window, operand 0, single buffered']
    #allocation3 [shape = 's32[1]{0}', space=sflag, size = 0x4, scoped, tag = 'scoped memory for conv_bn_gemm.1']
    #allocation4 [shape = 'u8[65536]{0}', space=vmem, size = 0x10000, scoped, tag = 'input window, operand 1, single buffered']
    #allocation5 [shape = 's32[1]{0}', space=sflag, size = 0x4, scoped, tag = 'scoped memory for conv_bn_gemm.1']
    %9 = vsyncpa [#allocation3], 0
    %10 = vsyncpa [#allocation5], 0
    // Predicated region
    $region2: #{conv_bn_gemm.1} parent=1 // pred_check
      _
    $region3: #{conv_bn_gemm.1} parent=1 // pred_check_branch
      %12 = sbr.rel (0) target = $region5
    $region4: #{conv_bn_gemm.1} parent=1 // pred_region
      %s14 = ssub.s32 2048, 2048
      %15 = vsyncadd [#allocation3], %s14
      %s16 = sshll.u32 [#allocation2], 4
      %s17 = int_to_ptr.vmem [resolvable:$true] %s16
      %22 = dma.hbm_to_vmem [thread:$0]  %s0, 2048, %s17, [#allocation3], 128, 128, 8
    $region5: #{conv_bn_gemm.1} parent=1 // pred_fallthru
      _
    // Predicated region
    $region6: #{conv_bn_gemm.1} parent=1 // pred_check
      _
    $region7: #{conv_bn_gemm.1} parent=1 // pred_check_branch
      %24 = sbr.rel (0) target = $region9
    $region8: #{conv_bn_gemm.1} parent=1 // pred_region
      %s26 = ssub.s32 2048, 2048
      %27 = vsyncadd [#allocation5], %s26
      %s28 = sshll.u32 [#allocation4], 4
      %s29 = int_to_ptr.vmem [resolvable:$true] %s28
      %34 = dma.hbm_to_vmem [thread:$0]  %s1, 2048, %s29, [#allocation5], 64, 64, 4
    $region9: #{conv_bn_gemm.1} parent=1 // pred_fallthru
      _
    // Predicated region
    $region10: #{conv_bn_gemm.1} parent=1 // pred_check
      _
    $region11: #{conv_bn_gemm.1} parent=1 // pred_check_branch
      %36 = sbr.rel (0) target = $region13
    $region12: #{conv_bn_gemm.1} parent=1 // pred_region
      _
    $region13: #{conv_bn_gemm.1} parent=1 // pred_fallthru
      _
    // Predicated region
    $region14: #{conv_bn_gemm.1} parent=1 // pred_check
      _
    $region15: #{conv_bn_gemm.1} parent=1 // pred_check_branch
      %38 = sbr.rel (0) target = $region17
    $region16: #{conv_bn_gemm.1} parent=1 // pred_region
      _
    $region17: #{conv_bn_gemm.1} parent=1 // pred_fallthru
      _
    // Predicated region
    $region18: #{conv_bn_gemm.1} parent=1 // pred_check
      _
    $region19: #{conv_bn_gemm.1} parent=1 // pred_check_branch
      %40 = sbr.rel (0) target = $region21
    $region20: #{conv_bn_gemm.1} parent=1 // pred_region
      %41 = dma.done [#allocation3], 2048
    $region21: #{conv_bn_gemm.1} parent=1 // pred_fallthru
      _
    // Predicated region
    $region22: #{conv_bn_gemm.1} parent=1 // pred_check
      _
    $region23: #{conv_bn_gemm.1} parent=1 // pred_check_branch
      %43 = sbr.rel (0) target = $region25
    $region24: #{conv_bn_gemm.1} parent=1 // pred_region
      %44 = dma.done [#allocation5], 2048
    $region25: #{conv_bn_gemm.1} parent=1 // pred_fallthru
      _
    %v46 = vld [vmem:[#allocation2] sm:$0xff]
    %v47 = vld [vmem:[#allocation2 + $0x8] sm:$0xff]
    %v48 = vld [vmem:[#allocation2 + $0x10] sm:$0xff]
    %v49 = vld [vmem:[#allocation2 + $0x18] sm:$0xff]
    %v50 = vld [vmem:[#allocation2 + $0x20] sm:$0xff]
    %v51 = vld [vmem:[#allocation2 + $0x28] sm:$0xff]
    %v52 = vld [vmem:[#allocation2 + $0x30] sm:$0xff]
    %v53 = vld [vmem:[#allocation2 + $0x38] sm:$0xff]
    %v54 = vld [vmem:[#allocation2 + $0x40] sm:$0xff]
    %v55 = vld [vmem:[#allocation2 + $0x48] sm:$0xff]
    %v56 = vld [vmem:[#allocation2 + $0x50] sm:$0xff]
    %v57 = vld [vmem:[#allocation2 + $0x58] sm:$0xff]
    %v58 = vld [vmem:[#allocation2 + $0x60] sm:$0xff]
    %v59 = vld [vmem:[#allocation2 + $0x68] sm:$0xff]
    %v60 = vld [vmem:[#allocation2 + $0x70] sm:$0xff]
    %v61 = vld [vmem:[#allocation2 + $0x78] sm:$0xff]
    %v62 = vld [vmem:[#allocation4] sm:$0xf]
    %v63 = vld [vmem:[#allocation4 + $0x4] sm:$0xf]
    %v64 = vld [vmem:[#allocation4 + $0x8] sm:$0xf]
    %v65 = vld [vmem:[#allocation4 + $0xc] sm:$0xf]
    %v66 = vld [vmem:[#allocation4 + $0x10] sm:$0xf]
    %v67 = vld [vmem:[#allocation4 + $0x14] sm:$0xf]
    %v68 = vld [vmem:[#allocation4 + $0x18] sm:$0xf]
    %v69 = vld [vmem:[#allocation4 + $0x1c] sm:$0xf]
    %v70 = vld [vmem:[#allocation4 + $0x20] sm:$0xf]
    %v71 = vld [vmem:[#allocation4 + $0x24] sm:$0xf]
    %v72 = vld [vmem:[#allocation4 + $0x28] sm:$0xf]
    %v73 = vld [vmem:[#allocation4 + $0x2c] sm:$0xf]
    %v74 = vld [vmem:[#allocation4 + $0x30] sm:$0xf]
    %v75 = vld [vmem:[#allocation4 + $0x34] sm:$0xf]
    %v76 = vld [vmem:[#allocation4 + $0x38] sm:$0xf]
    %v77 = vld [vmem:[#allocation4 + $0x3c] sm:$0xf]
    %v78 = vld [vmem:[#allocation4 + $0x40] sm:$0xf]
    %v79 = vld [vmem:[#allocation4 + $0x44] sm:$0xf]
    %v80 = vld [vmem:[#allocation4 + $0x48] sm:$0xf]
    %v81 = vld [vmem:[#allocation4 + $0x4c] sm:$0xf]
    %v82 = vld [vmem:[#allocation4 + $0x50] sm:$0xf]
    %v83 = vld [vmem:[#allocation4 + $0x54] sm:$0xf]
    %v84 = vld [vmem:[#allocation4 + $0x58] sm:$0xf]
    %v85 = vld [vmem:[#allocation4 + $0x5c] sm:$0xf]
    %v86 = vld [vmem:[#allocation4 + $0x60] sm:$0xf]
    %v87 = vld [vmem:[#allocation4 + $0x64] sm:$0xf]
    %v88 = vld [vmem:[#allocation4 + $0x68] sm:$0xf]
    %v89 = vld [vmem:[#allocation4 + $0x6c] sm:$0xf]
    %v90 = vld [vmem:[#allocation4 + $0x70] sm:$0xf]
    %v91 = vld [vmem:[#allocation4 + $0x74] sm:$0xf]
    %v92 = vld [vmem:[#allocation4 + $0x78] sm:$0xf]
    %v93 = vld [vmem:[#allocation4 + $0x7c] sm:$0xf]
    %v110 = vunpack.c.l.b16 %v46
    %v111 = vunpack.c.h.b16 %v46
    %v112 = vunpack.c.l.b16 %v47
    %v113 = vunpack.c.h.b16 %v47
    %v114 = vunpack.c.l.b16 %v48
    %v115 = vunpack.c.h.b16 %v48
    %v116 = vunpack.c.l.b16 %v49
    %v117 = vunpack.c.h.b16 %v49
    %v118 = vunpack.c.l.b16 %v50
    %v119 = vunpack.c.h.b16 %v50
    %v120 = vunpack.c.l.b16 %v51
    %v121 = vunpack.c.h.b16 %v51
    %v122 = vunpack.c.l.b16 %v52
    %v123 = vunpack.c.h.b16 %v52
    %v124 = vunpack.c.l.b16 %v53
    %v125 = vunpack.c.h.b16 %v53
    %v126 = vunpack.c.l.b16 %v54
    %v127 = vunpack.c.h.b16 %v54
    %v128 = vunpack.c.l.b16 %v55
    %v129 = vunpack.c.h.b16 %v55
    %v130 = vunpack.c.l.b16 %v56
    %v131 = vunpack.c.h.b16 %v56
    %v132 = vunpack.c.l.b16 %v57
    %v133 = vunpack.c.h.b16 %v57
    %v134 = vunpack.c.l.b16 %v58
    %v135 = vunpack.c.h.b16 %v58
    %v136 = vunpack.c.l.b16 %v59
    %v137 = vunpack.c.h.b16 %v59
    %v138 = vunpack.c.l.b16 %v60
    %v139 = vunpack.c.h.b16 %v60
    %v140 = vunpack.c.l.b16 %v61
    %v141 = vunpack.c.h.b16 %v61
    %v142 = vpack.c.b16 %v112, %v110
    %v143 = vpack.c.b16 %v113, %v111
    %v144 = vpack.c.b16 %v116, %v114
    %v145 = vpack.c.b16 %v117, %v115
    %v146 = vpack.c.b16 %v120, %v118
    %v147 = vpack.c.b16 %v121, %v119
    %v148 = vpack.c.b16 %v124, %v122
    %v149 = vpack.c.b16 %v125, %v123
    %v150 = vpack.c.b16 %v128, %v126
    %v151 = vpack.c.b16 %v129, %v127
    %v152 = vpack.c.b16 %v132, %v130
    %v153 = vpack.c.b16 %v133, %v131
    %v154 = vpack.c.b16 %v136, %v134
    %v155 = vpack.c.b16 %v137, %v135
    %v156 = vpack.c.b16 %v140, %v138
    %v157 = vpack.c.b16 %v141, %v139
    %v206 = vunpack.c.l.b16 %v62
    %v207 = vunpack.c.l.b16 %v63
    %v208 = vunpack.c.l.b16 %v64
    %v209 = vunpack.c.l.b16 %v65
    %v210 = vunpack.c.l.b16 %v66
    %v211 = vunpack.c.l.b16 %v67
    %v212 = vunpack.c.l.b16 %v68
    %v213 = vunpack.c.l.b16 %v69
    %v214 = vunpack.c.l.b16 %v70
    %v215 = vunpack.c.l.b16 %v71
    %v216 = vunpack.c.l.b16 %v72
    %v217 = vunpack.c.l.b16 %v73
    %v218 = vunpack.c.l.b16 %v74
    %v219 = vunpack.c.l.b16 %v75
    %v220 = vunpack.c.l.b16 %v76
    %v221 = vunpack.c.l.b16 %v77
    %v222 = vunpack.c.l.b16 %v78
    %v223 = vunpack.c.l.b16 %v79
    %v224 = vunpack.c.l.b16 %v80
    %v225 = vunpack.c.l.b16 %v81
    %v226 = vunpack.c.l.b16 %v82
    %v227 = vunpack.c.l.b16 %v83
    %v228 = vunpack.c.l.b16 %v84
    %v229 = vunpack.c.l.b16 %v85
    %v230 = vunpack.c.l.b16 %v86
    %v231 = vunpack.c.l.b16 %v87
    %v232 = vunpack.c.l.b16 %v88
    %v233 = vunpack.c.l.b16 %v89
    %v234 = vunpack.c.l.b16 %v90
    %v235 = vunpack.c.l.b16 %v91
    %v236 = vunpack.c.l.b16 %v92
    %v237 = vunpack.c.l.b16 %v93
    %v238 = vpack.c.b16 %v207, %v206
    %v239 = vpack.c.b16 %v209, %v208
    %v240 = vpack.c.b16 %v211, %v210
    %v241 = vpack.c.b16 %v213, %v212
    %v242 = vpack.c.b16 %v215, %v214
    %v243 = vpack.c.b16 %v217, %v216
    %v244 = vpack.c.b16 %v219, %v218
    %v245 = vpack.c.b16 %v221, %v220
    %v246 = vpack.c.b16 %v223, %v222
    %v247 = vpack.c.b16 %v225, %v224
    %v248 = vpack.c.b16 %v227, %v226
    %v249 = vpack.c.b16 %v229, %v228
    %v250 = vpack.c.b16 %v231, %v230
    %v251 = vpack.c.b16 %v233, %v232
    %v252 = vpack.c.b16 %v235, %v234
    %v253 = vpack.c.b16 %v237, %v236
    %270 = vmatprep.subr.bf16.mxu0 0
    %271 = vmatpush1.bf16.msra.mxu0 %v238
    %272 = vmatprep.subr.bf16.mxu0 0
    %273 = vmatpush1.bf16.msra.mxu0 %v239
    %274 = vmatprep.subr.bf16.mxu0 0
    %275 = vmatpush1.bf16.msra.mxu0 %v240
    %276 = vmatprep.subr.bf16.mxu0 0
    %277 = vmatpush1.bf16.msra.mxu0 %v241
    %278 = vmatprep.subr.bf16.mxu0 0
    %279 = vmatpush1.bf16.msra.mxu0 %v242
    %280 = vmatprep.subr.bf16.mxu0 0
    %281 = vmatpush1.bf16.msra.mxu0 %v243
    %282 = vmatprep.subr.bf16.mxu0 0
    %283 = vmatpush1.bf16.msra.mxu0 %v244
    %284 = vmatprep.subr.bf16.mxu0 0
    %285 = vmatpush1.bf16.msra.mxu0 %v245
    %286 = vmatprep.subr.bf16.mxu0 0
    %287 = vmatpush1.bf16.msra.mxu0 %v246
    %288 = vmatprep.subr.bf16.mxu0 0
    %289 = vmatpush1.bf16.msra.mxu0 %v247
    %290 = vmatprep.subr.bf16.mxu0 0
    %291 = vmatpush1.bf16.msra.mxu0 %v248
    %292 = vmatprep.subr.bf16.mxu0 0
    %293 = vmatpush1.bf16.msra.mxu0 %v249
    %294 = vmatprep.subr.bf16.mxu0 0
    %295 = vmatpush1.bf16.msra.mxu0 %v250
    %296 = vmatprep.subr.bf16.mxu0 0
    %297 = vmatpush1.bf16.msra.mxu0 %v251
    %298 = vmatprep.subr.bf16.mxu0 0
    %299 = vmatpush1.bf16.msra.mxu0 %v252
    %300 = vmatprep.subr.bf16.mxu0 0
    %301 = vmatpush1.bf16.msra.mxu0 %v253
    %302 = vmatprep.mubr.bf16.mxu0 %v143
    %303 = vmatmul.mubr.bf16.gmra.mrb[0].mxu0 %v142
    %v304 = vpop.f32.mrb[0].mxu0
    %v305 = vadd.f32 0.0, %v304
    %v306 = vpop.f32.mrb[0].mxu0
    %v307 = vpop.f32.mrb[0].mxu0
    %v308 = vadd.f32 0.0, %v307
    %v309 = vpop.f32.mrb[0].mxu0
    %310 = vmatprep.mubr.bf16.mxu0 %v145
    %311 = vmatmul.mubr.bf16.gmra.mrb[0].mxu0 %v144
    %v312 = vpop.f32.mrb[0].mxu0
    %v313 = vadd.f32 0.0, %v312
    %v314 = vpop.f32.mrb[0].mxu0
    %v315 = vpop.f32.mrb[0].mxu0
    %v316 = vadd.f32 0.0, %v315
    %v317 = vpop.f32.mrb[0].mxu0
    %318 = vmatprep.mubr.bf16.mxu0 %v147
    %319 = vmatmul.mubr.bf16.gmra.mrb[0].mxu0 %v146
    %v320 = vpop.f32.mrb[0].mxu0
    %v321 = vadd.f32 0.0, %v320
    %v322 = vpop.f32.mrb[0].mxu0
    %v323 = vpop.f32.mrb[0].mxu0
    %v324 = vadd.f32 0.0, %v323
    %v325 = vpop.f32.mrb[0].mxu0
    %326 = vmatprep.mubr.bf16.mxu0 %v149
    %327 = vmatmul.mubr.bf16.gmra.mrb[0].mxu0 %v148
    %v328 = vpop.f32.mrb[0].mxu0
    %v329 = vadd.f32 0.0, %v328
    %v330 = vpop.f32.mrb[0].mxu0
    %v331 = vpop.f32.mrb[0].mxu0
    %v332 = vadd.f32 0.0, %v331
    %v333 = vpop.f32.mrb[0].mxu0
    %334 = vmatprep.mubr.bf16.mxu0 %v151
    %335 = vmatmul.mubr.bf16.gmra.mrb[0].mxu0 %v150
    %v336 = vpop.f32.mrb[0].mxu0
    %v337 = vadd.f32 0.0, %v336
    %v338 = vpop.f32.mrb[0].mxu0
    %v339 = vpop.f32.mrb[0].mxu0
    %v340 = vadd.f32 0.0, %v339
    %v341 = vpop.f32.mrb[0].mxu0
    %342 = vmatprep.mubr.bf16.mxu0 %v153
    %343 = vmatmul.mubr.bf16.gmra.mrb[0].mxu0 %v152
    %v344 = vpop.f32.mrb[0].mxu0
    %v345 = vadd.f32 0.0, %v344
    %v346 = vpop.f32.mrb[0].mxu0
    %v347 = vpop.f32.mrb[0].mxu0
    %v348 = vadd.f32 0.0, %v347
    %v349 = vpop.f32.mrb[0].mxu0
    %350 = vmatprep.mubr.bf16.mxu0 %v155
    %351 = vmatmul.mubr.bf16.gmra.mrb[0].mxu0 %v154
    %v352 = vpop.f32.mrb[0].mxu0
    %v353 = vadd.f32 0.0, %v352
    %v354 = vpop.f32.mrb[0].mxu0
    %v355 = vpop.f32.mrb[0].mxu0
    %v356 = vadd.f32 0.0, %v355
    %v357 = vpop.f32.mrb[0].mxu0
    %358 = vmatprep.mubr.bf16.mxu0 %v157
    %359 = vmatmul.mubr.bf16.gmra.mrb[0].mxu0 %v156
    %v360 = vpop.f32.mrb[0].mxu0
    %v361 = vadd.f32 0.0, %v360
    %v362 = vpop.f32.mrb[0].mxu0
    %v363 = vpop.f32.mrb[0].mxu0
    %v364 = vadd.f32 0.0, %v363
    %v365 = vpop.f32.mrb[0].mxu0
    %366 = vdwg.mxu0
    %p367 = scmp.eq.s32.totalorder 0, 0
    // Predicated region
    $region26: #{conv_bn_gemm.1} parent=1 // pred_check
      %p368 = pneg %p367
    $region27: #{conv_bn_gemm.1} parent=1 // pred_check_branch
      %370 = sbr.rel (%p368) target = $region29
    $region28: #{conv_bn_gemm.1} parent=1 // pred_region
      %371 = vst [vmem:[%s4] sm:$0xff] %v305
      %372 = vst [vmem:[%s4 + $0x8] sm:$0xff] %v308
      %373 = vst [vmem:[%s4 + $0x10] sm:$0xff] %v313
      %374 = vst [vmem:[%s4 + $0x18] sm:$0xff] %v316
      %375 = vst [vmem:[%s4 + $0x20] sm:$0xff] %v321
      %376 = vst [vmem:[%s4 + $0x28] sm:$0xff] %v324
      %377 = vst [vmem:[%s4 + $0x30] sm:$0xff] %v329
      %378 = vst [vmem:[%s4 + $0x38] sm:$0xff] %v332
      %379 = vst [vmem:[%s4 + $0x40] sm:$0xff] %v337
      %380 = vst [vmem:[%s4 + $0x48] sm:$0xff] %v340
      %381 = vst [vmem:[%s4 + $0x50] sm:$0xff] %v345
      %382 = vst [vmem:[%s4 + $0x58] sm:$0xff] %v348
      %383 = vst [vmem:[%s4 + $0x60] sm:$0xff] %v353
      %384 = vst [vmem:[%s4 + $0x68] sm:$0xff] %v356
      %385 = vst [vmem:[%s4 + $0x70] sm:$0xff] %v361
      %386 = vst [vmem:[%s4 + $0x78] sm:$0xff] %v364
    $region29: #{conv_bn_gemm.1} parent=1 // pred_fallthru
      _
    %p387 = scmp.gt.s32.totalorder 0, 0
    // Predicated region
    $region30: #{conv_bn_gemm.1} parent=1 // pred_check
      %p388 = pneg %p387
    $region31: #{conv_bn_gemm.1} parent=1 // pred_check_branch
      %390 = sbr.rel (%p388) target = $region33
    $region32: #{conv_bn_gemm.1} parent=1 // pred_region
      %v391 = vld [vmem:[%s4] sm:$0xff]
      %v392 = vld [vmem:[%s4 + $0x8] sm:$0xff]
      %v393 = vld [vmem:[%s4 + $0x10] sm:$0xff]
      %v394 = vld [vmem:[%s4 + $0x18] sm:$0xff]
      %v395 = vld [vmem:[%s4 + $0x20] sm:$0xff]
      %v396 = vld [vmem:[%s4 + $0x28] sm:$0xff]
      %v397 = vld [vmem:[%s4 + $0x30] sm:$0xff]
      %v398 = vld [vmem:[%s4 + $0x38] sm:$0xff]
      %v399 = vld [vmem:[%s4 + $0x40] sm:$0xff]
      %v400 = vld [vmem:[%s4 + $0x48] sm:$0xff]
      %v401 = vld [vmem:[%s4 + $0x50] sm:$0xff]
      %v402 = vld [vmem:[%s4 + $0x58] sm:$0xff]
      %v403 = vld [vmem:[%s4 + $0x60] sm:$0xff]
      %v404 = vld [vmem:[%s4 + $0x68] sm:$0xff]
      %v405 = vld [vmem:[%s4 + $0x70] sm:$0xff]
      %v406 = vld [vmem:[%s4 + $0x78] sm:$0xff]
      %v407 = vadd.f32 %v391, %v305
      %v408 = vadd.f32 %v392, %v308
      %v409 = vadd.f32 %v393, %v313
      %v410 = vadd.f32 %v394, %v316
      %v411 = vadd.f32 %v395, %v321
      %v412 = vadd.f32 %v396, %v324
      %v413 = vadd.f32 %v397, %v329
      %v414 = vadd.f32 %v398, %v332
      %v415 = vadd.f32 %v399, %v337
      %v416 = vadd.f32 %v400, %v340
      %v417 = vadd.f32 %v401, %v345
      %v418 = vadd.f32 %v402, %v348
      %v419 = vadd.f32 %v403, %v353
      %v420 = vadd.f32 %v404, %v356
      %v421 = vadd.f32 %v405, %v361
      %v422 = vadd.f32 %v406, %v364
      %423 = vst [vmem:[%s4] sm:$0xff] %v407
      %424 = vst [vmem:[%s4 + $0x8] sm:$0xff] %v408
      %425 = vst [vmem:[%s4 + $0x10] sm:$0xff] %v409
      %426 = vst [vmem:[%s4 + $0x18] sm:$0xff] %v410
      %427 = vst [vmem:[%s4 + $0x20] sm:$0xff] %v411
      %428 = vst [vmem:[%s4 + $0x28] sm:$0xff] %v412
      %429 = vst [vmem:[%s4 + $0x30] sm:$0xff] %v413
      %430 = vst [vmem:[%s4 + $0x38] sm:$0xff] %v414
      %431 = vst [vmem:[%s4 + $0x40] sm:$0xff] %v415
      %432 = vst [vmem:[%s4 + $0x48] sm:$0xff] %v416
      %433 = vst [vmem:[%s4 + $0x50] sm:$0xff] %v417
      %434 = vst [vmem:[%s4 + $0x58] sm:$0xff] %v418
      %435 = vst [vmem:[%s4 + $0x60] sm:$0xff] %v419
      %436 = vst [vmem:[%s4 + $0x68] sm:$0xff] %v420
      %437 = vst [vmem:[%s4 + $0x70] sm:$0xff] %v421
      %438 = vst [vmem:[%s4 + $0x78] sm:$0xff] %v422
    $region33: #{conv_bn_gemm.1} parent=1 // pred_fallthru
      _
    // Predicated region
    $region34: #{conv_bn_gemm.1} parent=1 // pred_check
      %p439 = pneg %p367
    $region35: #{conv_bn_gemm.1} parent=1 // pred_check_branch
      %441 = sbr.rel (%p439) target = $region37
    $region36: #{conv_bn_gemm.1} parent=1 // pred_region
      %v442 = vld [vmem:[%s4] sm:$0xff]
      %v443 = vld [vmem:[%s4 + $0x8] sm:$0xff]
      %v444 = vld [vmem:[%s4 + $0x10] sm:$0xff]
      %v445 = vld [vmem:[%s4 + $0x18] sm:$0xff]
      %v446 = vld [vmem:[%s4 + $0x20] sm:$0xff]
      %v447 = vld [vmem:[%s4 + $0x28] sm:$0xff]
      %v448 = vld [vmem:[%s4 + $0x30] sm:$0xff]
      %v449 = vld [vmem:[%s4 + $0x38] sm:$0xff]
      %v450 = vld [vmem:[%s4 + $0x40] sm:$0xff]
      %v451 = vld [vmem:[%s4 + $0x48] sm:$0xff]
      %v452 = vld [vmem:[%s4 + $0x50] sm:$0xff]
      %v453 = vld [vmem:[%s4 + $0x58] sm:$0xff]
      %v454 = vld [vmem:[%s4 + $0x60] sm:$0xff]
      %v455 = vld [vmem:[%s4 + $0x68] sm:$0xff]
      %v456 = vld [vmem:[%s4 + $0x70] sm:$0xff]
      %v457 = vld [vmem:[%s4 + $0x78] sm:$0xff]
      %v458 = vadd.f32 %v442, %v443
      %v459 = vadd.f32 %v458, %v444
      %v460 = vadd.f32 %v459, %v445
      %v461 = vadd.f32 %v460, %v446
      %v462 = vadd.f32 %v461, %v447
      %v463 = vadd.f32 %v462, %v448
      %v464 = vadd.f32 %v463, %v449
      %v465 = vadd.f32 %v464, %v450
      %v466 = vadd.f32 %v465, %v451
      %v467 = vadd.f32 %v466, %v452
      %v468 = vadd.f32 %v467, %v453
      %v469 = vadd.f32 %v468, %v454
      %v470 = vadd.f32 %v469, %v455
      %v471 = vadd.f32 %v470, %v456
      %v472 = vadd.f32 %v471, %v457
      %v473 = vrot.slane %v472, 4
      %v474 = vadd.f32 %v472, %v473
      %v475 = vrot.slane %v474, 2
      %v476 = vadd.f32 %v474, %v475
      %v477 = vrot.slane %v476, 1
      %v478 = vadd.f32 %v476, %v477
      %v479 = vmul.f32 %v478, 0.0078125
      %v480 = vmul.f32 %v442, %v442
      %v481 = vmul.f32 %v443, %v443
      %v482 = vmul.f32 %v444, %v444
      %v483 = vmul.f32 %v445, %v445
      %v484 = vmul.f32 %v446, %v446
      %v485 = vmul.f32 %v447, %v447
      %v486 = vmul.f32 %v448, %v448
      %v487 = vmul.f32 %v449, %v449
      %v488 = vmul.f32 %v450, %v450
      %v489 = vmul.f32 %v451, %v451
      %v490 = vmul.f32 %v452, %v452
      %v491 = vmul.f32 %v453, %v453
      %v492 = vmul.f32 %v454, %v454
      %v493 = vmul.f32 %v455, %v455
      %v494 = vmul.f32 %v456, %v456
      %v495 = vmul.f32 %v457, %v457
      %v496 = vadd.f32 %v480, %v481
      %v497 = vadd.f32 %v496, %v482
      %v498 = vadd.f32 %v497, %v483
      %v499 = vadd.f32 %v498, %v484
      %v500 = vadd.f32 %v499, %v485
      %v501 = vadd.f32 %v500, %v486
      %v502 = vadd.f32 %v501, %v487
      %v503 = vadd.f32 %v502, %v488
      %v504 = vadd.f32 %v503, %v489
      %v505 = vadd.f32 %v504, %v490
      %v506 = vadd.f32 %v505, %v491
      %v507 = vadd.f32 %v506, %v492
      %v508 = vadd.f32 %v507, %v493
      %v509 = vadd.f32 %v508, %v494
      %v510 = vadd.f32 %v509, %v495
      %v511 = vrot.slane %v510, 4
      %v512 = vadd.f32 %v510, %v511
      %v513 = vrot.slane %v512, 2
      %v514 = vadd.f32 %v512, %v513
      %v515 = vrot.slane %v514, 1
      %v516 = vadd.f32 %v514, %v515
      %v517 = vmul.f32 %v516, 0.0078125
      %v518 = vmul.f32 %v479, %v479
      %v519 = vsub.f32 %v517, %v518
      %v520 = vmax.f32 %v519, 0.0
      %v521 = vadd.f32 %v520, 1e-05
      %v522 = vrsqrt.pop %v521
      %v523 = vld [vmem:[%s2] sm:$0x1]
      %v524 = vmul.f32 %v522, %v523
      %v525 = vld [vmem:[%s3] sm:$0x1]
      %v526 = vmul.f32 %v479, %v524
      %v527 = vsub.f32 %v525, %v526
      %v528 = vlaneseq
      %v529 = vshrl.u32 %v528, 7
      %v530 = vsub.s32 0, %v529
      %v531 = vrot.slane %v524, %v530
      %v532 = vmul.f32 %v442, %v531
      %v533 = vmul.f32 %v443, %v531
      %v534 = vmul.f32 %v444, %v531
      %v535 = vmul.f32 %v445, %v531
      %v536 = vmul.f32 %v446, %v531
      %v537 = vmul.f32 %v447, %v531
      %v538 = vmul.f32 %v448, %v531
      %v539 = vmul.f32 %v449, %v531
      %v540 = vmul.f32 %v450, %v531
      %v541 = vmul.f32 %v451, %v531
      %v542 = vmul.f32 %v452, %v531
      %v543 = vmul.f32 %v453, %v531
      %v544 = vmul.f32 %v454, %v531
      %v545 = vmul.f32 %v455, %v531
      %v546 = vmul.f32 %v456, %v531
      %v547 = vmul.f32 %v457, %v531
      %v549 = vlaneseq
      %v550 = vshrl.u32 %v549, 7
      %v551 = vsub.s32 0, %v550
      %v552 = vrot.slane %v527, %v551
      %v554 = vadd.f32 %v532, %v552
      %v555 = vadd.f32 %v533, %v552
      %v556 = vadd.f32 %v534, %v552
      %v557 = vadd.f32 %v535, %v552
      %v558 = vadd.f32 %v536, %v552
      %v559 = vadd.f32 %v537, %v552
      %v560 = vadd.f32 %v538, %v552
      %v561 = vadd.f32 %v539, %v552
      %v562 = vadd.f32 %v540, %v552
      %v563 = vadd.f32 %v541, %v552
      %v564 = vadd.f32 %v542, %v552
      %v565 = vadd.f32 %v543, %v552
      %v566 = vadd.f32 %v544, %v552
      %v567 = vadd.f32 %v545, %v552
      %v568 = vadd.f32 %v546, %v552
      %v569 = vadd.f32 %v547, %v552
      %v570 = vmax.f32 %v554, 0.0
      %v571 = vmax.f32 %v555, 0.0
      %v572 = vmax.f32 %v556, 0.0
      %v573 = vmax.f32 %v557, 0.0
      %v574 = vmax.f32 %v558, 0.0
      %v575 = vmax.f32 %v559, 0.0
      %v576 = vmax.f32 %v560, 0.0
      %v577 = vmax.f32 %v561, 0.0
      %v578 = vmax.f32 %v562, 0.0
      %v579 = vmax.f32 %v563, 0.0
      %v580 = vmax.f32 %v564, 0.0
      %v581 = vmax.f32 %v565, 0.0
      %v582 = vmax.f32 %v566, 0.0
      %v583 = vmax.f32 %v567, 0.0
      %v584 = vmax.f32 %v568, 0.0
      %v585 = vmax.f32 %v569, 0.0
      %586 = vst [vmem:[%s4] sm:$0xff] %v570
      %587 = vst [vmem:[%s4 + $0x8] sm:$0xff] %v571
      %588 = vst [vmem:[%s4 + $0x10] sm:$0xff] %v572
      %589 = vst [vmem:[%s4 + $0x18] sm:$0xff] %v573
      %590 = vst [vmem:[%s4 + $0x20] sm:$0xff] %v574
      %591 = vst [vmem:[%s4 + $0x28] sm:$0xff] %v575
      %592 = vst [vmem:[%s4 + $0x30] sm:$0xff] %v576
      %593 = vst [vmem:[%s4 + $0x38] sm:$0xff] %v577
      %594 = vst [vmem:[%s4 + $0x40] sm:$0xff] %v578
      %595 = vst [vmem:[%s4 + $0x48] sm:$0xff] %v579
      %596 = vst [vmem:[%s4 + $0x50] sm:$0xff] %v580
      %597 = vst [vmem:[%s4 + $0x58] sm:$0xff] %v581
      %598 = vst [vmem:[%s4 + $0x60] sm:$0xff] %v582
      %599 = vst [vmem:[%s4 + $0x68] sm:$0xff] %v583
      %600 = vst [vmem:[%s4 + $0x70] sm:$0xff] %v584
      %601 = vst [vmem:[%s4 + $0x78] sm:$0xff] %v585
    $region37: #{conv_bn_gemm.1} parent=1 // pred_fallthru
      _
    // Predicated region
    $region38: #{conv_bn_gemm.1} parent=1 // pred_check
      _
    $region39: #{conv_bn_gemm.1} parent=1 // pred_check_branch
      %603 = sbr.rel (0) target = $region41
    $region40: #{conv_bn_gemm.1} parent=1 // pred_region
      _
    $region41: #{conv_bn_gemm.1} parent=1 // pred_fallthru
      _
    // Predicated region
    $region42: #{conv_bn_gemm.1} parent=1 // pred_check
      _
    $region43: #{conv_bn_gemm.1} parent=1 // pred_check_branch
      %605 = sbr.rel (0) target = $region45
    $region44: #{conv_bn_gemm.1} parent=1 // pred_region
      _
    $region45: #{conv_bn_gemm.1} parent=1 // pred_fallthru
      _
    %606 = vsyncpa [#allocation3], 1
    %607 = vsyncpa [#allocation5], 1

</llo_original>
